<compile_context>
chip_gen: v6e
topology: v6e:2x2x1
jax: 0.10.0
libtpu: 0.0.40
codegen_flags: <defaults>
</compile_context>

<pallas_src>
import jax
import jax.numpy as jnp
from jax.experimental import pallas as pl
from jax.experimental.pallas import tpu as pltpu


_UNROLL_K_MAX = 32  # unroll the sublane reduction when K is small (pure VPU)


def _argmin_sublane_kernel(x_ref, o_ref):
    """x_ref: (K, TS) float block; o_ref: (1, TS) int32 block.

    Per lane, compute the index of the first minimum along the sublane axis
    (axis 0).  Ties -> smallest index; a NaN beats every non-NaN value and
    the first NaN wins (torch / numpy argmin semantics).
    """
    k_len = x_ref.shape[0]

    if k_len <= _UNROLL_K_MAX:
        # Unrolled running (value, index) update: strictly VPU work.
        best_val = x_ref[0:1, :]                                   # (1, TS)
        best_idx = jnp.zeros(best_val.shape, jnp.int32)
        for k in range(1, k_len):
            v = x_ref[k:k + 1, :]
            v_nan = v != v
            b_nan = best_val != best_val
            better = (v < best_val) | (v_nan & jnp.logical_not(b_nan))
            best_val = jnp.where(better, v, best_val)
            best_idx = jnp.where(better, jnp.int32(k), best_idx)
        o_ref[...] = best_idx
    else:
        # Large-K fallback: vectorized reductions over the sublane axis.
        x = x_ref[...]
        row = jax.lax.broadcasted_iota(jnp.int32, x.shape, 0)
        nan_mask = x != x
        has_nan = jnp.any(nan_mask, axis=0, keepdims=True)
        first_nan = jnp.min(jnp.where(nan_mask, row, jnp.int32(k_len)),
                            axis=0, keepdims=True)
        mn = jnp.min(x, axis=0, keepdims=True)
        first_min = jnp.min(jnp.where(x == mn, row, jnp.int32(k_len)),
                            axis=0, keepdims=True)
        o_ref[...] = jnp.where(has_nan, first_nan, first_min)


def _choose_lane_tile(suffix, k_len, elem_bytes, budget_bytes=8 << 20):
    """Largest lane tile that divides `suffix`, is a multiple of 128, and keeps
    the double-buffered input block under `budget_bytes` (safe for v7x's
    smaller VMEM).  If `suffix` is not 128-aligned, fall back to the full
    extent (allowed when the block equals the full array dim)."""
    if suffix % 128 != 0:
        return suffix
    max_ts = (budget_bytes // (2 * max(k_len, 1) * elem_bytes)) // 128 * 128
    ts = min(suffix, max(128, max_ts))
    while suffix % ts != 0:
        ts -= 128
    return ts


def argmin_keepdim(x, dim):
    """Equivalent of torch.argmin(x, dim=dim, keepdim=True) (int32 indices)."""
    ndim = x.ndim
    dim = dim % ndim
    shape = x.shape
    k_len = shape[dim]

    prefix = 1
    for s in shape[:dim]:
        prefix *= s
    suffix = 1
    for s in shape[dim + 1:]:
        suffix *= s

    # Pure row-major reshape: reduced axis -> sublanes, trailing -> lanes.
    # (No moveaxis, so no HBM transpose is materialized.)
    x3 = x.reshape(prefix, k_len, suffix)

    ts = _choose_lane_tile(suffix, k_len, x.dtype.itemsize)
    grid = (prefix, suffix // ts)

    # TODO(synk): very large K (e.g. vocab-axis argmin) would need a K-tiled
    # running-argmin across grid steps; single-block-K is fine for this model.
    idx3 = pl.pallas_call(
        _argmin_sublane_kernel,
        out_shape=jax.ShapeDtypeStruct((prefix, 1, suffix), jnp.int32),
        grid=grid,
        in_specs=[pl.BlockSpec((None, k_len, ts), lambda p, s: (p, 0, s))],
        out_specs=pl.BlockSpec((None, 1, ts), lambda p, s: (p, 0, s)),
        compiler_params=pltpu.CompilerParams(
            dimension_semantics=("parallel", "parallel")),
    )(x3)

    # keepdim=True output shape -- again a pure reshape, no transpose.
    return idx3.reshape(shape[:dim] + (1,) + shape[dim + 1:])


if __name__ == "__main__":
    # Matches the burn-import ONNX test usage: Model(argmin_dim=1).
    argmin_dim = 1
    key = jax.random.PRNGKey(0)
    x = jax.random.normal(key, (2, 4, 16, 16), dtype=jnp.float32)

    y = argmin_keepdim(x, argmin_dim)
    y = jax.block_until_ready(y)

    # Sanity check against plain JAX reference.
    ref = jnp.argmin(x, axis=argmin_dim, keepdims=True).astype(jnp.int32)
    assert y.shape == (2, 1, 16, 16), y.shape
    assert bool(jnp.all(y == ref)), "mismatch vs jnp.argmin reference"

    print("KERNEL_OK")
</pallas_src>

<mosaic_0001>
module attributes {stable_mosaic.version = 11 : i64} {
  func.func @_argmin_sublane_kernel(%arg0: i32, %arg1: i32, %arg2: memref<1x4x256xf32, #tpu.memory_space<vmem>>, %arg3: memref<1x1x256xi32, #tpu.memory_space<vmem>>) attributes {dimension_semantics = [#tpu.dimension_semantics<parallel>, #tpu.dimension_semantics<parallel>], iteration_bounds = array<i64: 2, 1>, scalar_prefetch = 0 : i64, scratch_operands = 0 : i64, tpu.core_type = #tpu.core_type<tc>, window_params = [{transform_indices = @transform_0, window_bounds = array<i64: 1, 4, 256>}, {transform_indices = @transform_1, window_bounds = array<i64: 1, 1, 256>}]} {
    %c0 = arith.constant 0 : index
    %c0_0 = arith.constant 0 : index
    %c0_1 = arith.constant 0 : index
    %0 = vector.load %arg2[%c0, %c0_0, %c0_1] : memref<1x4x256xf32, #tpu.memory_space<vmem>>, vector<1x1x256xf32>
    %1 = vector.shape_cast %0 : vector<1x1x256xf32> to vector<1x256xf32>
    %c0_i32 = arith.constant 0 : i32
    %2 = vector.broadcast %c0_i32 : i32 to vector<1x256xi32>
    %c0_2 = arith.constant 0 : index
    %c1 = arith.constant 1 : index
    %c0_3 = arith.constant 0 : index
    %3 = vector.load %arg2[%c0_2, %c1, %c0_3] : memref<1x4x256xf32, #tpu.memory_space<vmem>>, vector<1x1x256xf32>
    %4 = vector.shape_cast %3 : vector<1x1x256xf32> to vector<1x256xf32>
    %5 = arith.cmpf one, %4, %4 : vector<1x256xf32>
    %6 = arith.cmpf one, %1, %1 : vector<1x256xf32>
    %7 = arith.cmpf olt, %4, %1 : vector<1x256xf32>
    %cst = arith.constant dense<true> : vector<1x256xi1>
    %8 = arith.xori %6, %cst : vector<1x256xi1>
    %9 = arith.andi %5, %8 : vector<1x256xi1>
    %10 = arith.ori %7, %9 : vector<1x256xi1>
    %11 = arith.select %10, %4, %1 : vector<1x256xi1>, vector<1x256xf32>
    %c1_i32 = arith.constant 1 : i32
    %12 = vector.broadcast %c1_i32 : i32 to vector<1x256xi32>
    %13 = arith.select %10, %12, %2 : vector<1x256xi1>, vector<1x256xi32>
    %c0_4 = arith.constant 0 : index
    %c2 = arith.constant 2 : index
    %c0_5 = arith.constant 0 : index
    %14 = vector.load %arg2[%c0_4, %c2, %c0_5] : memref<1x4x256xf32, #tpu.memory_space<vmem>>, vector<1x1x256xf32>
    %15 = vector.shape_cast %14 : vector<1x1x256xf32> to vector<1x256xf32>
    %16 = arith.cmpf one, %15, %15 : vector<1x256xf32>
    %17 = arith.cmpf one, %11, %11 : vector<1x256xf32>
    %18 = arith.cmpf olt, %15, %11 : vector<1x256xf32>
    %cst_6 = arith.constant dense<true> : vector<1x256xi1>
    %19 = arith.xori %17, %cst_6 : vector<1x256xi1>
    %20 = arith.andi %16, %19 : vector<1x256xi1>
    %21 = arith.ori %18, %20 : vector<1x256xi1>
    %22 = arith.select %21, %15, %11 : vector<1x256xi1>, vector<1x256xf32>
    %c2_i32 = arith.constant 2 : i32
    %23 = vector.broadcast %c2_i32 : i32 to vector<1x256xi32>
    %24 = arith.select %21, %23, %13 : vector<1x256xi1>, vector<1x256xi32>
    %c0_7 = arith.constant 0 : index
    %c3 = arith.constant 3 : index
    %c0_8 = arith.constant 0 : index
    %25 = vector.load %arg2[%c0_7, %c3, %c0_8] : memref<1x4x256xf32, #tpu.memory_space<vmem>>, vector<1x1x256xf32>
    %26 = vector.shape_cast %25 : vector<1x1x256xf32> to vector<1x256xf32>
    %27 = arith.cmpf one, %26, %26 : vector<1x256xf32>
    %28 = arith.cmpf one, %22, %22 : vector<1x256xf32>
    %29 = arith.cmpf olt, %26, %22 : vector<1x256xf32>
    %cst_9 = arith.constant dense<true> : vector<1x256xi1>
    %30 = arith.xori %28, %cst_9 : vector<1x256xi1>
    %31 = arith.andi %27, %30 : vector<1x256xi1>
    %32 = arith.ori %29, %31 : vector<1x256xi1>
    %c3_i32 = arith.constant 3 : i32
    %33 = vector.broadcast %c3_i32 : i32 to vector<1x256xi32>
    %34 = arith.select %32, %33, %24 : vector<1x256xi1>, vector<1x256xi32>
    %c0_10 = arith.constant 0 : index
    %c0_11 = arith.constant 0 : index
    %c0_12 = arith.constant 0 : index
    %35 = vector.load %arg3[%c0_10, %c0_11, %c0_12] : memref<1x1x256xi32, #tpu.memory_space<vmem>>, vector<1x1x256xi32>
    %36 = vector.shape_cast %35 : vector<1x1x256xi32> to vector<1x256xi32>
    %37 = vector.shape_cast %34 : vector<1x256xi32> to vector<1x1x256xi32>
    tpu.vector_store %arg3[%c0_10, %c0_11, %c0_12], %37 {strides = array<i32>} : memref<1x1x256xi32, #tpu.memory_space<vmem>>, vector<1x1x256xi32>,
    return
  }
  func.func @transform_0(%arg0: i32, %arg1: i32) -> (i32, i32, i32) {
    %c0_i32 = arith.constant 0 : i32
    %c0_i32_0 = arith.constant 0 : i32
    return %arg0, %c0_i32, %arg1 : i32, i32, i32
  }
  func.func @transform_1(%arg0: i32, %arg1: i32) -> (i32, i32, i32) {
    %c0_i32 = arith.constant 0 : i32
    %c0_i32_0 = arith.constant 0 : i32
    return %arg0, %c0_i32, %arg1 : i32, i32, i32
  }
}

</mosaic_0001>

<llo_original>
// kernel: tpu_custom_call.1
$region0: #{tpu_custom_call.1}
  #allocation0 [shape = 'u32[]', space=smem, size = 0x4, offset = 0x4, fixed_abs, tag = 'smem constant byte address 0x4 - core index']
  #allocation1 [shape = 'u32[144,128]{1,0:T(1,128)}', space=vmem, size = 0x12000, scoped, tag = 'internal scratch']
  %s0 = inlined_call_operand.hbm [shape: f32[2,4,256], index: 0, kind: input, shape index: {}]
  %s1 = inlined_call_operand.hbm [shape: s32[2,1,256], index: 1, kind: output, shape index: {}]
  %s2 = sld [smem:[#allocation0]]
  $region41: #{tpu_custom_call.1} parent=0
    _
  %s4 = ssub.s32 1, %s2
  %s5 = scalar_select 0, %s4, %s2
  $region1: #{tpu_custom_call.1} parent=0
    #allocation2 [shape = 'u8[8192]{0}', space=vmem, size = 0x2000, scoped, tag = 'input window, operand 0']
    #allocation3 [shape = 's32[2]{0}', space=sflag, size = 0x8, scoped, tag = 'scoped memory for tpu_custom_call.1']
    #allocation4 [shape = 's32[2]{0}', space=sflag, size = 0x8, scoped, tag = 'scoped memory for tpu_custom_call.1']
    #allocation5 [shape = 'u8[2048]{0}', space=vmem, size = 0x800, scoped, tag = 'output window, operand 0']
    %6 = vsyncpa [#allocation3], 0
    %s7 = scalar_lea.sflag [#allocation3], 1
    %8 = vsyncpa %s7, 0
    %9 = vsyncpa [#allocation4], 0
    %s10 = scalar_lea.sflag [#allocation4], 1
    %11 = vsyncpa %s10, 0
    loop: start=0, step=1, limit=4
    $region2: #{tpu_custom_call.1} parent=1 // loop_pre_header
      _
    $region3: #{tpu_custom_call.1} parent=1 // loop_header
      %s13 = sphi 0, %s17
      %p14 = scmp.ge.s32.totalorder %s13, 4
      %s20 = sphi 0, %s32
      %s21 = sphi 0, %s28
      %s22 = sphi 0, %s20
      %s23 = sphi 0, %s21
      %s24 = sphi 0, %s22
      %s25 = sphi 0, %s23
      %s37 = sphi 0, %s39
      %s40 = sphi 0, %s37
      %s41 = sphi 0, %s40
      %s57 = sphi 0, %s41
      %s65 = sphi 0, %s67
      %s68 = sphi 0, %s65
      %s69 = sphi 0, %s68
      %s85 = sphi 0, %s69
    $region4: #{tpu_custom_call.1} parent=1 // loop_header_branch
      %16 = sbr.rel (%p14) target = $region8
    $region5: #{tpu_custom_call.1} parent=1 // loop_body
      %s18 = ssub.s32 %s13, 1
      %s19 = ssub.s32 %s13, 2
      %s26 = sadd.s32 1, %s21
      %p27 = scmp.ge.s32.totalorder %s26, 1
      %s28 = scalar_select %p27, 0, %s26
      %s29 = sadd.s32 1, %s20
      %s30 = scalar_select %p27, %s29, %s20
      %p31 = scmp.ge.s32.totalorder %s30, 2
      %s32 = scalar_select %p31, 0, %s30
      %s33 = ssub.s32 %s20, %s32
      %s34 = ssub.s32 %s21, %s28
      %s35 = sor.u32 %s33, %s34
      %p36 = scmp.eq.s32.totalorder %s35, 0
      %s38 = sadd.s32 %s37, 1
      %s39 = scalar_select %p36, %s37, %s38
      %p42 = pneg %p36
      %p43 = scmp.eq.s32.totalorder %s13, 1
      %p44 = por %p42, %p43
      %p45 = scmp.ne.s32.totalorder %s37, %s40
      %p46 = scmp.eq.s32.totalorder %s13, 0
      %p47 = por %p45, %p46
      %p48 = scmp.ne.s32.totalorder %s37, %s40
      %p49 = scmp.eq.s32.totalorder %s18, 1
      %p50 = por %p48, %p49
      %p51 = scmp.ne.s32.totalorder %s40, %s41
      %p52 = scmp.eq.s32.totalorder %s18, 0
      %p53 = por %p51, %p52
      %p54 = scmp.ne.s32.totalorder %s40, %s41
      %p55 = scmp.eq.s32.totalorder %s19, 1
      %p56 = por %p54, %p55
      %p58 = scmp.ne.s32.totalorder %s41, %s57
      %p59 = scmp.eq.s32.totalorder %s19, 0
      %p60 = por %p58, %p59
      %s61 = ssub.s32 %s20, %s32
      %s62 = ssub.s32 %s21, %s28
      %s63 = sor.u32 %s61, %s62
      %p64 = scmp.eq.s32.totalorder %s63, 0
      %s66 = sadd.s32 %s65, 1
      %s67 = scalar_select %p64, %s65, %s66
      %p70 = pneg %p64
      %p71 = scmp.eq.s32.totalorder %s13, 1
      %p72 = por %p70, %p71
      %p73 = scmp.ne.s32.totalorder %s65, %s68
      %p74 = scmp.eq.s32.totalorder %s13, 0
      %p75 = por %p73, %p74
      %p76 = scmp.ne.s32.totalorder %s65, %s68
      %p77 = scmp.eq.s32.totalorder %s18, 1
      %p78 = por %p76, %p77
      %p79 = scmp.ne.s32.totalorder %s68, %s69
      %p80 = scmp.eq.s32.totalorder %s18, 0
      %p81 = por %p79, %p80
      %p82 = scmp.ne.s32.totalorder %s68, %s69
      %p83 = scmp.eq.s32.totalorder %s19, 1
      %p84 = por %p82, %p83
      %p86 = scmp.ne.s32.totalorder %s69, %s85
      %p87 = scmp.eq.s32.totalorder %s19, 0
      %p88 = por %p86, %p87
      %p89 = scmp.le.s32.totalorder 1, %s13
      %p90 = scmp.lt.s32.totalorder %s13, 3
      %p91 = pnand %p89, %p90
      %p92 = pneg %p91
      // Predicated region
      $region9: #{tpu_custom_call.1} parent=5 // pred_check
        _
      $region10: #{tpu_custom_call.1} parent=5 // pred_check_branch
        %94 = sbr.rel (%p91) target = $region12
      $region11: #{tpu_custom_call.1} parent=5 // pred_region
        %s95 = ssub.s32 %s13, 1
      $region12: #{tpu_custom_call.1} parent=5 // pred_fallthru
        _
      %p96 = scmp.lt.s32.totalorder %s13, 2
      // Predicated region
      $region13: #{tpu_custom_call.1} parent=5 // pred_check
        %p97 = pneg %p96
      $region14: #{tpu_custom_call.1} parent=5 // pred_check_branch
        %99 = sbr.rel (%p97) target = $region16
      $region15: #{tpu_custom_call.1} parent=5 // pred_region
        // Predicated region
        $region17: #{tpu_custom_call.1} parent=15 // pred_check
          %p100 = pneg %p47
        $region18: #{tpu_custom_call.1} parent=15 // pred_check_branch
          %102 = sbr.rel (%p100) target = $region20
        $region19: #{tpu_custom_call.1} parent=15 // pred_region
          %s103 = sand.u32 %s37, 1
          %s104 = scalar_lea.sflag [#allocation3], %s103
          %s105 = sand.u32 %s37, 1
          %s106 = smul.addr %s105, 8
          %s107 = scalar_lea.vmem [#allocation2], %s106
          %s108 = smul.u32 2, %s21
          %s110 = ssub.s32 128, 128
          %111 = vsyncadd %s104, %s110
          %s112 = smul.addr %s20, 2
          %s113 = sadd.s32 %s108, %s112
          %s114 = smul.addr %s113, 64
          %s115 = scalar_lea.hbm %s0, %s114
          %s117 = sshll.u32 %s107, 4
          %s118 = int_to_ptr.vmem [resolvable:$true] %s117
          %120 = dma.hbm_to_vmem [thread:$0]  %s115, 128, %s118, %s104
        $region20: #{tpu_custom_call.1} parent=15 // pred_fallthru
          _
      $region16: #{tpu_custom_call.1} parent=5 // pred_fallthru
        _
      %p121 = scmp.le.s32.totalorder 1, %s13
      %p122 = scmp.lt.s32.totalorder %s13, 3
      %p123 = pnand %p121, %p122
      %p124 = pneg %p123
      // Predicated region
      $region21: #{tpu_custom_call.1} parent=5 // pred_check
        _
      $region22: #{tpu_custom_call.1} parent=5 // pred_check_branch
        %126 = sbr.rel (%p123) target = $region24
      $region23: #{tpu_custom_call.1} parent=5 // pred_region
        %s127 = ssub.s32 %s13, 1
        %s128 = sand.u32 %s40, 1
        %s129 = scalar_lea.sflag [#allocation3], %s128
        %s130 = sand.u32 %s40, 1
        %s131 = smul.addr %s130, 8
        %s132 = scalar_lea.vmem [#allocation2], %s131
        // Predicated region
        $region25: #{tpu_custom_call.1} parent=23 // pred_check
          %p133 = pneg %p53
        $region26: #{tpu_custom_call.1} parent=23 // pred_check_branch
          %135 = sbr.rel (%p133) target = $region28
        $region27: #{tpu_custom_call.1} parent=23 // pred_region
          %136 = dma.done %s129, 128
        $region28: #{tpu_custom_call.1} parent=23 // pred_fallthru
          _
        %s137 = sand.u32 %s40, 1
        %s138 = scalar_lea.sflag [#allocation3], %s137
        %s139 = sand.u32 %s40, 1
        %s140 = smul.addr %s139, 8
        %s141 = scalar_lea.vmem [#allocation2], %s140
        %p142 = pneg %p53
        %p143 = pneg %p50
        %p144 = pneg %p81
        %p145 = pneg %p78
        %s146 = sand.u32 %s68, 1
        %s147 = scalar_lea.sflag [#allocation4], %s146
        %s148 = sand.u32 %s68, 1
        %s149 = smul.addr %s148, 2
        %s150 = scalar_lea.vmem [#allocation5], %s149
        %s151 = smul.u32 2, %s23
        %s152 = smul.u32 2, %s23
        %v153 = vld [vmem:[%s132] ss:$4 sm:$0x3]
        %s154 = scalar_lea.vmem %s132, 1 [#allocation2]
        %v155 = vld [vmem:[%s154] ss:$4 sm:$0x3]
        %vm156 = vcmp.ne.f32.partialorder %v155, %v155
        %vm157 = vcmp.ne.f32.partialorder %v153, %v153
        %vm158 = vcmp.lt.f32.partialorder %v155, %v153
        %vm159 = vmxor %vm157, 1
        %vm160 = vmand %vm156, %vm159
        %vm161 = vmor %vm158, %vm160
        %v162 = vsel %vm161, %v155, %v153
        %v163 = vsel %vm161, 1, 0
        %s164 = scalar_lea.vmem %s132, 2 [#allocation2]
        %v165 = vld [vmem:[%s164] ss:$4 sm:$0x3]
        %vm166 = vcmp.ne.f32.partialorder %v165, %v165
        %vm167 = vcmp.ne.f32.partialorder %v162, %v162
        %vm168 = vcmp.lt.f32.partialorder %v165, %v162
        %vm169 = vmxor %vm167, 1
        %vm170 = vmand %vm166, %vm169
        %vm171 = vmor %vm168, %vm170
        %v172 = vsel %vm171, %v165, %v162
        %v173 = vsel %vm171, 2, %v163
        %s174 = scalar_lea.vmem %s132, 3 [#allocation2]
        %v175 = vld [vmem:[%s174] ss:$4 sm:$0x3]
        %vm176 = vcmp.ne.f32.partialorder %v175, %v175
        %vm177 = vcmp.ne.f32.partialorder %v172, %v172
        %vm178 = vcmp.lt.f32.partialorder %v175, %v172
        %vm179 = vmxor %vm177, 1
        %vm180 = vmand %vm176, %vm179
        %vm181 = vmor %vm178, %vm180
        %v182 = vsel %vm181, 3, %v173
        %v183 = vlaneseq
        %vm184 = vcmp.ge.s32.totalorder %v183, 0
        %vm185 = vcmp.lt.s32.totalorder %v183, 256
        %vm186 = vmand %vm184, %vm185
        %187 = vst.msk [vmem:[%s150] sm:$0x3] %vm186, %v182
        %s188 = sand.u32 %s68, 1
        %s189 = scalar_lea.sflag [#allocation4], %s188
        %s190 = sand.u32 %s68, 1
        %s191 = smul.addr %s190, 2
        %s192 = scalar_lea.vmem [#allocation5], %s191
        // Predicated region
        $region29: #{tpu_custom_call.1} parent=23 // pred_check
          %p193 = pneg %p78
        $region30: #{tpu_custom_call.1} parent=23 // pred_check_branch
          %195 = sbr.rel (%p193) target = $region32
        $region31: #{tpu_custom_call.1} parent=23 // pred_region
          %s196 = smul.u32 2, %s23
          %s198 = ssub.s32 32, 32
          %199 = vsyncadd %s189, %s198
          %s200 = smul.addr %s22, 2
          %s201 = sadd.s32 %s196, %s200
          %s202 = smul.addr %s201, 16
          %s203 = scalar_lea.hbm %s1, %s202
          %s205 = sshll.u32 %s192, 4
          %s206 = int_to_ptr.vmem [resolvable:$true] %s205
          %208 = dma.vmem_to_hbm [thread:$0]  %s206, 32, %s203, %s189
        $region32: #{tpu_custom_call.1} parent=23 // pred_fallthru
          _
      $region24: #{tpu_custom_call.1} parent=5 // pred_fallthru
        _
      %p209 = scmp.le.s32.totalorder 2, %s13
      // Predicated region
      $region33: #{tpu_custom_call.1} parent=5 // pred_check
        %p210 = pneg %p209
      $region34: #{tpu_custom_call.1} parent=5 // pred_check_branch
        %212 = sbr.rel (%p210) target = $region36
      $region35: #{tpu_custom_call.1} parent=5 // pred_region
        %s213 = ssub.s32 %s13, 2
        // Predicated region
        $region37: #{tpu_custom_call.1} parent=35 // pred_check
          %p214 = pneg %p84
        $region38: #{tpu_custom_call.1} parent=35 // pred_check_branch
          %216 = sbr.rel (%p214) target = $region40
        $region39: #{tpu_custom_call.1} parent=35 // pred_region
          %s217 = sand.u32 %s69, 1
          %s218 = scalar_lea.sflag [#allocation4], %s217
          %s219 = sand.u32 %s69, 1
          %s220 = smul.addr %s219, 2
          %s221 = scalar_lea.vmem [#allocation5], %s220
          %222 = dma.done %s218, 32
        $region40: #{tpu_custom_call.1} parent=35 // pred_fallthru
          _
      $region36: #{tpu_custom_call.1} parent=5 // pred_fallthru
        _
    $region6: #{tpu_custom_call.1} parent=1 // loop_footer
      %s17 = sadd.s32 1, %s13
    $region7: #{tpu_custom_call.1} parent=1 // loop_footer_branch
      %12 = sbr.rel target = $region3
    $region8: #{tpu_custom_call.1} parent=1 // loop_exit
      _
    %223 = vsyncpa [#allocation3], 1
    %s224 = scalar_lea.sflag [#allocation3], 1
    %225 = vsyncpa %s224, 1
    %226 = vsyncpa [#allocation4], 1
    %s227 = scalar_lea.sflag [#allocation4], 1
    %228 = vsyncpa %s227, 1

</llo_original>
